<compile_context>
chip_gen: v7x
topology: tpu7x:2x2x1
jax: 0.10.0
libtpu: 0.0.40
codegen_flags: <defaults>
</compile_context>

<pallas_src>
import functools
import math

import jax
import jax.numpy as jnp
from jax.experimental import pallas as pl
from jax.experimental.pallas import tpu as pltpu


def _round_up(x: int, m: int) -> int:
    return ((x + m - 1) // m) * m


def _res_head_kernel(x_ref, w_ref, b_ref, o_ref, *, inv_hw: float):
    # x_ref: (TB, C, HW)   w_ref: (C, TN)   b_ref: (1, TN)   o_ref: (TB, TN) f32
    # Global average pool over the flattened spatial axis (f32 accumulation).
    x = x_ref[...].astype(jnp.float32)
    pooled = jnp.sum(x, axis=-1) * inv_hw                      # (TB, C)

    # Feed the MXU in the weight's dtype (bf16 weights -> bf16 matmul, f32 acc).
    pooled = pooled.astype(w_ref.dtype)
    acc = jnp.dot(
        pooled,
        w_ref[...],
        preferred_element_type=jnp.float32,
        precision=jax.lax.Precision.HIGHEST,
    )                                                          # (TB, TN) f32
    o_ref[...] = acc + b_ref[...].astype(jnp.float32)


def res_head_forward(
    x: jax.Array,
    weight: jax.Array,   # (nc, C)  -- PyTorch nn.Linear layout
    bias: jax.Array,     # (nc,)
    *,
    tb: int = 128,
    tn: int = 512,
    x_tile_bytes: int = 4 * 1024 * 1024,
) -> jax.Array:
    B, C, H, W = x.shape
    nc, c_w = weight.shape
    assert C == c_w, "weight in_features must match channel count"
    assert bias.shape == (nc,)
    HW = H * W

    x3 = x.reshape(B, C, HW)

    # --- output (nc) tiling: lane-dense, multiple of 128, padding in wrapper ---
    Np = _round_up(nc, 128)
    TN = min(tn, Np)
    Np = _round_up(Np, TN)

    # --- batch tiling: keep the (TB, C, HW) input tile within a VMEM budget ---
    bytes_per_row = max(1, C * HW * x3.dtype.itemsize)
    tb_fit = max(8, (x_tile_bytes // bytes_per_row) // 8 * 8)
    TB = min(tb, tb_fit, _round_up(B, 8))
    Bp = _round_up(B, TB)

    if Bp != B:
        x3 = jnp.pad(x3, ((0, Bp - B), (0, 0), (0, 0)))

    w_t = weight.T                      # (C, nc): contraction on sublane axis
    b2 = bias.reshape(1, nc)
    if Np != nc:
        w_t = jnp.pad(w_t, ((0, 0), (0, Np - nc)))
        b2 = jnp.pad(b2, ((0, 0), (0, Np - nc)))

    grid = (Bp // TB, Np // TN)
    kernel = functools.partial(_res_head_kernel, inv_hw=1.0 / HW)

    flops = Bp * C * HW + 2 * Bp * C * Np + Bp * Np
    bytes_accessed = (
        x3.size * x3.dtype.itemsize
        + w_t.size * w_t.dtype.itemsize
        + b2.size * b2.dtype.itemsize
        + Bp * Np * 4
    )

    out = pl.pallas_call(
        kernel,
        out_shape=jax.ShapeDtypeStruct((Bp, Np), jnp.float32),
        grid_spec=pltpu.PrefetchScalarGridSpec(
            num_scalar_prefetch=0,
            grid=grid,
            in_specs=[
                # x block index map is constant in j -> not re-DMA'd across nc tiles
                pl.BlockSpec((TB, C, HW), lambda i, j: (i, 0, 0)),
                pl.BlockSpec((C, TN), lambda i, j: (0, j)),
                pl.BlockSpec((1, TN), lambda i, j: (0, j)),
            ],
            out_specs=pl.BlockSpec((TB, TN), lambda i, j: (i, j)),
        ),
        compiler_params=pltpu.CompilerParams(
            dimension_semantics=("parallel", "parallel"),
            vmem_limit_bytes=48 * 1024 * 1024,
        ),
        cost_estimate=pl.CostEstimate(
            flops=flops, transcendentals=0, bytes_accessed=bytes_accessed
        ),
    )(x3, w_t, b2)

    # Strip padding; emit in the input dtype (f32 in, f32 out like nn.Linear).
    return out[:B, :nc].astype(x.dtype)


def _res_head_ref(x, weight, bias):
    pooled = jnp.mean(x.astype(jnp.float32), axis=(2, 3))
    return pooled @ weight.T.astype(jnp.float32) + bias.astype(jnp.float32)


if __name__ == "__main__":
    key = jax.random.PRNGKey(0)
    k_x, k_w, k_b = jax.random.split(key, 3)

    batch, channels, spatial, nc = 4, 32, 8, 10

    x = jax.random.normal(k_x, (batch, channels, spatial, spatial), dtype=jnp.float32)
    bound = 1.0 / math.sqrt(channels)  # nn.Linear default-init scale (value irrelevant to check)
    weight = jax.random.uniform(
        k_w, (nc, channels), dtype=jnp.float32, minval=-bound, maxval=bound
    )
    bias = jax.random.uniform(
        k_b, (nc,), dtype=jnp.float32, minval=-bound, maxval=bound
    )

    out = res_head_forward(x, weight, bias)
    out = jax.block_until_ready(out)

    ref = _res_head_ref(x, weight, bias)
    assert out.shape == (batch, nc)
    assert jnp.allclose(out, ref.astype(out.dtype), atol=1e-5, rtol=1e-5), "mismatch vs reference"

    print("KERNEL_OK")
</pallas_src>

<mosaic_0001>
module attributes {stable_mosaic.version = 11 : i64} {
  func.func @_res_head_kernel(%arg0: i32, %arg1: i32, %arg2: memref<8x32x64xf32, #tpu.memory_space<vmem>>, %arg3: memref<32x128xf32, #tpu.memory_space<vmem>>, %arg4: memref<1x128xf32, #tpu.memory_space<vmem>>, %arg5: memref<8x128xf32, #tpu.memory_space<vmem>>) attributes {dimension_semantics = [#tpu.dimension_semantics<parallel>, #tpu.dimension_semantics<parallel>], iteration_bounds = array<i64: 1, 1>, scalar_prefetch = 0 : i64, scratch_operands = 0 : i64, tpu.core_type = #tpu.core_type<tc>, window_params = [{transform_indices = @transform_0, window_bounds = array<i64: 8, 32, 64>}, {transform_indices = @transform_1, window_bounds = array<i64: 32, 128>}, {transform_indices = @transform_2, window_bounds = array<i64: 1, 128>}, {transform_indices = @transform_3, window_bounds = array<i64: 8, 128>}]} {
    %c0 = arith.constant 0 : index
    %c0_0 = arith.constant 0 : index
    %c0_1 = arith.constant 0 : index
    %0 = vector.load %arg2[%c0, %c0_0, %c0_1] : memref<8x32x64xf32, #tpu.memory_space<vmem>>, vector<8x32x64xf32>
    %cst = arith.constant dense<0.000000e+00> : vector<8x32xf32>
    %1 = vector.multi_reduction <add>, %0, %cst [2] : vector<8x32x64xf32> to vector<8x32xf32>
    %cst_2 = arith.constant 1.562500e-02 : f32
    %2 = vector.broadcast %cst_2 : f32 to vector<8x32xf32>
    %3 = arith.mulf %1, %2 : vector<8x32xf32>
    %c0_3 = arith.constant 0 : index
    %c0_4 = arith.constant 0 : index
    %4 = vector.load %arg3[%c0_3, %c0_4] : memref<32x128xf32, #tpu.memory_space<vmem>>, vector<32x128xf32>
    %cst_5 = arith.constant dense<0.000000e+00> : vector<8x128xf32>
    %5 = tpu.matmul %3, %4, %cst_5 {dimension_numbers = #tpu.dot_dimension_numbers<[1], [0], [0], [1], [0, 0, 1, 1], [], []>, precision = #tpu.contract_precision<fp32>} : vector<8x32xf32>, vector<32x128xf32>, vector<8x128xf32> -> vector<8x128xf32>
    %c0_6 = arith.constant 0 : index
    %c0_7 = arith.constant 0 : index
    %6 = vector.load %arg4[%c0_6, %c0_7] : memref<1x128xf32, #tpu.memory_space<vmem>>, vector<1x128xf32>
    %7 = vector.broadcast %6 : vector<1x128xf32> to vector<8x128xf32>
    %8 = arith.addf %5, %7 : vector<8x128xf32>
    %c0_8 = arith.constant 0 : index
    %c0_9 = arith.constant 0 : index
    %9 = vector.load %arg5[%c0_8, %c0_9] : memref<8x128xf32, #tpu.memory_space<vmem>>, vector<8x128xf32>
    tpu.vector_store %arg5[%c0_8, %c0_9], %8 {strides = array<i32>} : memref<8x128xf32, #tpu.memory_space<vmem>>, vector<8x128xf32>,
    return
  }
  func.func @transform_0(%arg0: i32, %arg1: i32) -> (i32, i32, i32) {
    %c0_i32 = arith.constant 0 : i32
    %c0_i32_0 = arith.constant 0 : i32
    %c0_i32_1 = arith.constant 0 : i32
    return %arg0, %c0_i32, %c0_i32_0 : i32, i32, i32
  }
  func.func @transform_1(%arg0: i32, %arg1: i32) -> (i32, i32) {
    %c0_i32 = arith.constant 0 : i32
    %c0_i32_0 = arith.constant 0 : i32
    return %c0_i32, %arg1 : i32, i32
  }
  func.func @transform_2(%arg0: i32, %arg1: i32) -> (i32, i32) {
    %c0_i32 = arith.constant 0 : i32
    %c0_i32_0 = arith.constant 0 : i32
    return %c0_i32, %arg1 : i32, i32
  }
  func.func @transform_3(%arg0: i32, %arg1: i32) -> (i32, i32) {
    %c0_i32 = arith.constant 0 : i32
    return %arg0, %arg1 : i32, i32
  }
}

</mosaic_0001>

<llo_original>
// kernel: tpu_custom_call.1
$region0: #{tpu_custom_call.1}
  #allocation0 [shape = 'u32[]', space=smem, size = 0x4, offset = 0x4, fixed_abs, tag = 'smem constant byte address 0x4 - core index']
  #allocation1 [shape = 'u32[144,128]{1,0:T(1,128)}', space=vmem, size = 0x12000, scoped, tag = 'internal scratch']
  %s0 = inlined_call_operand.hbm [shape: f32[8,32,64], index: 0, kind: input, shape index: {}]
  %s1 = inlined_call_operand.hbm [shape: f32[32,128], index: 1, kind: input, shape index: {}]
  %s2 = inlined_call_operand.vmem [shape: f32[1,128], index: 2, kind: input, shape index: {}]
  %s3 = inlined_call_operand.hbm [shape: f32[8,128], index: 3, kind: output, shape index: {}]
  %s4 = sld [smem:[#allocation0]]
  $region30: #{tpu_custom_call.1} parent=0
    _
  %s6 = ssub.s32 1, %s4
  %s7 = scalar_select 0, %s6, %s4
  $region1: #{tpu_custom_call.1} parent=0
    #allocation2 [shape = 'u8[131072]{0}', space=vmem, size = 0x20000, scoped, tag = 'input window, operand 0, single buffered']
    #allocation3 [shape = 's32[1]{0}', space=sflag, size = 0x4, scoped, tag = 'scoped memory for tpu_custom_call.1']
    #allocation4 [shape = 's32[1]{0}', space=sflag, size = 0x4, scoped, tag = 'scoped memory for tpu_custom_call.1']
    #allocation5 [shape = 'u8[16384]{0}', space=vmem, size = 0x4000, scoped, tag = 'input window, operand 1, single buffered']
    #allocation6 [shape = 's32[1]{0}', space=sflag, size = 0x4, scoped, tag = 'scoped memory for tpu_custom_call.1']
    #allocation7 [shape = 'u8[4096]{0}', space=vmem, size = 0x1000, scoped, tag = 'output window, operand 0, single buffered']
    %8 = vsyncpa [#allocation3], 0
    %9 = vsyncpa [#allocation6], 0
    %10 = vsyncpa [#allocation4], 0
    // Predicated region
    $region2: #{tpu_custom_call.1} parent=1 // pred_check
      _
    $region3: #{tpu_custom_call.1} parent=1 // pred_check_branch
      %12 = sbr.rel (0) target = $region5
    $region4: #{tpu_custom_call.1} parent=1 // pred_region
      %s14 = ssub.s32 4096, 4096
      %15 = vsyncadd [#allocation3], %s14
      %s16 = sshll.u32 [#allocation2], 4
      %s17 = int_to_ptr.vmem [resolvable:$true] %s16
      %22 = dma.hbm_to_vmem [thread:$0]  %s0, 4096, %s17, [#allocation3], 128, 128, 8
    $region5: #{tpu_custom_call.1} parent=1 // pred_fallthru
      _
    // Predicated region
    $region6: #{tpu_custom_call.1} parent=1 // pred_check
      _
    $region7: #{tpu_custom_call.1} parent=1 // pred_check_branch
      %24 = sbr.rel (0) target = $region9
    $region8: #{tpu_custom_call.1} parent=1 // pred_region
      %s26 = ssub.s32 512, 512
      %27 = vsyncadd [#allocation6], %s26
      %s28 = sshll.u32 [#allocation5], 4
      %s29 = int_to_ptr.vmem [resolvable:$true] %s28
      %34 = dma.hbm_to_vmem [thread:$0]  %s1, 512, %s29, [#allocation6], 128, 128, 8
    $region9: #{tpu_custom_call.1} parent=1 // pred_fallthru
      _
    // Predicated region
    $region10: #{tpu_custom_call.1} parent=1 // pred_check
      _
    $region11: #{tpu_custom_call.1} parent=1 // pred_check_branch
      %36 = sbr.rel (0) target = $region13
    $region12: #{tpu_custom_call.1} parent=1 // pred_region
      _
    $region13: #{tpu_custom_call.1} parent=1 // pred_fallthru
      _
    // Predicated region
    $region14: #{tpu_custom_call.1} parent=1 // pred_check
      _
    $region15: #{tpu_custom_call.1} parent=1 // pred_check_branch
      %38 = sbr.rel (0) target = $region17
    $region16: #{tpu_custom_call.1} parent=1 // pred_region
      %39 = dma.done [#allocation3], 4096
    $region17: #{tpu_custom_call.1} parent=1 // pred_fallthru
      _
    // Predicated region
    $region18: #{tpu_custom_call.1} parent=1 // pred_check
      _
    $region19: #{tpu_custom_call.1} parent=1 // pred_check_branch
      %41 = sbr.rel (0) target = $region21
    $region20: #{tpu_custom_call.1} parent=1 // pred_region
      %42 = dma.done [#allocation6], 512
    $region21: #{tpu_custom_call.1} parent=1 // pred_fallthru
      _
    %v43 = vld [vmem:[#allocation2] sm:$0xff]
    %v44 = vld [vmem:[#allocation2 + $0x8] sm:$0xff]
    %v45 = vld [vmem:[#allocation2 + $0x10] sm:$0xff]
    %v46 = vld [vmem:[#allocation2 + $0x18] sm:$0xff]
    %v47 = vld [vmem:[#allocation2 + $0x20] sm:$0xff]
    %v48 = vld [vmem:[#allocation2 + $0x28] sm:$0xff]
    %v49 = vld [vmem:[#allocation2 + $0x30] sm:$0xff]
    %v50 = vld [vmem:[#allocation2 + $0x38] sm:$0xff]
    %v51 = vld [vmem:[#allocation2 + $0x40] sm:$0xff]
    %v52 = vld [vmem:[#allocation2 + $0x48] sm:$0xff]
    %v53 = vld [vmem:[#allocation2 + $0x50] sm:$0xff]
    %v54 = vld [vmem:[#allocation2 + $0x58] sm:$0xff]
    %v55 = vld [vmem:[#allocation2 + $0x60] sm:$0xff]
    %v56 = vld [vmem:[#allocation2 + $0x68] sm:$0xff]
    %v57 = vld [vmem:[#allocation2 + $0x70] sm:$0xff]
    %v58 = vld [vmem:[#allocation2 + $0x78] sm:$0xff]
    %v59 = vld [vmem:[#allocation2 + $0x80] sm:$0xff]
    %v60 = vld [vmem:[#allocation2 + $0x88] sm:$0xff]
    %v61 = vld [vmem:[#allocation2 + $0x90] sm:$0xff]
    %v62 = vld [vmem:[#allocation2 + $0x98] sm:$0xff]
    %v63 = vld [vmem:[#allocation2 + $0xa0] sm:$0xff]
    %v64 = vld [vmem:[#allocation2 + $0xa8] sm:$0xff]
    %v65 = vld [vmem:[#allocation2 + $0xb0] sm:$0xff]
    %v66 = vld [vmem:[#allocation2 + $0xb8] sm:$0xff]
    %v67 = vld [vmem:[#allocation2 + $0xc0] sm:$0xff]
    %v68 = vld [vmem:[#allocation2 + $0xc8] sm:$0xff]
    %v69 = vld [vmem:[#allocation2 + $0xd0] sm:$0xff]
    %v70 = vld [vmem:[#allocation2 + $0xd8] sm:$0xff]
    %v71 = vld [vmem:[#allocation2 + $0xe0] sm:$0xff]
    %v72 = vld [vmem:[#allocation2 + $0xe8] sm:$0xff]
    %v73 = vld [vmem:[#allocation2 + $0xf0] sm:$0xff]
    %v74 = vld [vmem:[#allocation2 + $0xf8] sm:$0xff]
    %vm75 = vcmask 523264
    %v76 = vsel %vm75, %v43, 0.0
    %77 = vadd.xlane.f32.xlu0 %v76
    %v78 = vpop.xlane.xlu0 %77
    %v79 = vsel %vm75, %v44, 0.0
    %80 = vadd.xlane.f32.xlu0 %v79
    %v81 = vpop.xlane.xlu0 %80
    %v82 = vsel %vm75, %v45, 0.0
    %83 = vadd.xlane.f32.xlu0 %v82
    %v84 = vpop.xlane.xlu0 %83
    %v85 = vsel %vm75, %v46, 0.0
    %86 = vadd.xlane.f32.xlu0 %v85
    %v87 = vpop.xlane.xlu0 %86
    %v88 = vsel %vm75, %v47, 0.0
    %89 = vadd.xlane.f32.xlu0 %v88
    %v90 = vpop.xlane.xlu0 %89
    %v91 = vsel %vm75, %v48, 0.0
    %92 = vadd.xlane.f32.xlu0 %v91
    %v93 = vpop.xlane.xlu0 %92
    %v94 = vsel %vm75, %v49, 0.0
    %95 = vadd.xlane.f32.xlu0 %v94
    %v96 = vpop.xlane.xlu0 %95
    %v97 = vsel %vm75, %v50, 0.0
    %98 = vadd.xlane.f32.xlu0 %v97
    %v99 = vpop.xlane.xlu0 %98
    %v100 = vsel %vm75, %v51, 0.0
    %101 = vadd.xlane.f32.xlu0 %v100
    %v102 = vpop.xlane.xlu0 %101
    %v103 = vsel %vm75, %v52, 0.0
    %104 = vadd.xlane.f32.xlu0 %v103
    %v105 = vpop.xlane.xlu0 %104
    %v106 = vsel %vm75, %v53, 0.0
    %107 = vadd.xlane.f32.xlu0 %v106
    %v108 = vpop.xlane.xlu0 %107
    %v109 = vsel %vm75, %v54, 0.0
    %110 = vadd.xlane.f32.xlu0 %v109
    %v111 = vpop.xlane.xlu0 %110
    %v112 = vsel %vm75, %v55, 0.0
    %113 = vadd.xlane.f32.xlu0 %v112
    %v114 = vpop.xlane.xlu0 %113
    %v115 = vsel %vm75, %v56, 0.0
    %116 = vadd.xlane.f32.xlu0 %v115
    %v117 = vpop.xlane.xlu0 %116
    %v118 = vsel %vm75, %v57, 0.0
    %119 = vadd.xlane.f32.xlu0 %v118
    %v120 = vpop.xlane.xlu0 %119
    %v121 = vsel %vm75, %v58, 0.0
    %122 = vadd.xlane.f32.xlu0 %v121
    %v123 = vpop.xlane.xlu0 %122
    %v124 = vsel %vm75, %v59, 0.0
    %125 = vadd.xlane.f32.xlu0 %v124
    %v126 = vpop.xlane.xlu0 %125
    %v127 = vsel %vm75, %v60, 0.0
    %128 = vadd.xlane.f32.xlu0 %v127
    %v129 = vpop.xlane.xlu0 %128
    %v130 = vsel %vm75, %v61, 0.0
    %131 = vadd.xlane.f32.xlu0 %v130
    %v132 = vpop.xlane.xlu0 %131
    %v133 = vsel %vm75, %v62, 0.0
    %134 = vadd.xlane.f32.xlu0 %v133
    %v135 = vpop.xlane.xlu0 %134
    %v136 = vsel %vm75, %v63, 0.0
    %137 = vadd.xlane.f32.xlu0 %v136
    %v138 = vpop.xlane.xlu0 %137
    %v139 = vsel %vm75, %v64, 0.0
    %140 = vadd.xlane.f32.xlu0 %v139
    %v141 = vpop.xlane.xlu0 %140
    %v142 = vsel %vm75, %v65, 0.0
    %143 = vadd.xlane.f32.xlu0 %v142
    %v144 = vpop.xlane.xlu0 %143
    %v145 = vsel %vm75, %v66, 0.0
    %146 = vadd.xlane.f32.xlu0 %v145
    %v147 = vpop.xlane.xlu0 %146
    %v148 = vsel %vm75, %v67, 0.0
    %149 = vadd.xlane.f32.xlu0 %v148
    %v150 = vpop.xlane.xlu0 %149
    %v151 = vsel %vm75, %v68, 0.0
    %152 = vadd.xlane.f32.xlu0 %v151
    %v153 = vpop.xlane.xlu0 %152
    %v154 = vsel %vm75, %v69, 0.0
    %155 = vadd.xlane.f32.xlu0 %v154
    %v156 = vpop.xlane.xlu0 %155
    %v157 = vsel %vm75, %v70, 0.0
    %158 = vadd.xlane.f32.xlu0 %v157
    %v159 = vpop.xlane.xlu0 %158
    %v160 = vsel %vm75, %v71, 0.0
    %161 = vadd.xlane.f32.xlu0 %v160
    %v162 = vpop.xlane.xlu0 %161
    %v163 = vsel %vm75, %v72, 0.0
    %164 = vadd.xlane.f32.xlu0 %v163
    %v165 = vpop.xlane.xlu0 %164
    %v166 = vsel %vm75, %v73, 0.0
    %167 = vadd.xlane.f32.xlu0 %v166
    %v168 = vpop.xlane.xlu0 %167
    %v169 = vsel %vm75, %v74, 0.0
    %170 = vadd.xlane.f32.xlu0 %v169
    %v171 = vpop.xlane.xlu0 %170
    %v172 = vmul.f32 %v78, 0.015625
    %v173 = vmul.f32 %v81, 0.015625
    %v174 = vmul.f32 %v84, 0.015625
    %v175 = vmul.f32 %v87, 0.015625
    %v176 = vmul.f32 %v90, 0.015625
    %v177 = vmul.f32 %v93, 0.015625
    %v178 = vmul.f32 %v96, 0.015625
    %v179 = vmul.f32 %v99, 0.015625
    %v180 = vmul.f32 %v102, 0.015625
    %v181 = vmul.f32 %v105, 0.015625
    %v182 = vmul.f32 %v108, 0.015625
    %v183 = vmul.f32 %v111, 0.015625
    %v184 = vmul.f32 %v114, 0.015625
    %v185 = vmul.f32 %v117, 0.015625
    %v186 = vmul.f32 %v120, 0.015625
    %v187 = vmul.f32 %v123, 0.015625
    %v188 = vmul.f32 %v126, 0.015625
    %v189 = vmul.f32 %v129, 0.015625
    %v190 = vmul.f32 %v132, 0.015625
    %v191 = vmul.f32 %v135, 0.015625
    %v192 = vmul.f32 %v138, 0.015625
    %v193 = vmul.f32 %v141, 0.015625
    %v194 = vmul.f32 %v144, 0.015625
    %v195 = vmul.f32 %v147, 0.015625
    %v196 = vmul.f32 %v150, 0.015625
    %v197 = vmul.f32 %v153, 0.015625
    %v198 = vmul.f32 %v156, 0.015625
    %v199 = vmul.f32 %v159, 0.015625
    %v200 = vmul.f32 %v162, 0.015625
    %v201 = vmul.f32 %v165, 0.015625
    %v202 = vmul.f32 %v168, 0.015625
    %v203 = vmul.f32 %v171, 0.015625
    %v204 = vld [vmem:[#allocation5] sm:$0xff]
    %v205 = vld [vmem:[#allocation5 + $0x8] sm:$0xff]
    %v206 = vld [vmem:[#allocation5 + $0x10] sm:$0xff]
    %v207 = vld [vmem:[#allocation5 + $0x18] sm:$0xff]
    %v208 = vld [vmem:[%s2] sm:$0x1]
    %v210 = vlaneseq
    %v211 = vshrl.u32 %v210, 7
    %v212 = vsub.s32 0, %v211
    %v213 = vrot.slane %v208, %v212
    %v247 = vlaneseq
    %v248 = vand.u32 %v247, 127
    %v249 = vlaneseq
    %v250 = vshrl.u32 %v249, 7
    %v251 = vsub.s32 %v248, %v250
    %v252 = vrot.slane %v172, %v251
    %v253 = vadd.s32 %v248, 4294967288
    %v254 = vlaneseq
    %v255 = vshrl.u32 %v254, 7
    %v256 = vsub.s32 %v253, %v255
    %v257 = vrot.slane %v173, %v256
    %vm258 = vcmask 130112
    %v259 = vsel %vm258, %v257, %v252
    %v260 = vadd.s32 %v248, 4294967280
    %v261 = vlaneseq
    %v262 = vshrl.u32 %v261, 7
    %v263 = vsub.s32 %v260, %v262
    %v264 = vrot.slane %v174, %v263
    %vm265 = vcmask 195712
    %v266 = vsel %vm265, %v264, %v259
    %v267 = vadd.s32 %v248, 4294967272
    %v268 = vlaneseq
    %v269 = vshrl.u32 %v268, 7
    %v270 = vsub.s32 %v267, %v269
    %v271 = vrot.slane %v175, %v270
    %vm272 = vcmask 261312
    %v273 = vsel %vm272, %v271, %v266
    %v274 = vlaneseq
    %v275 = vshrl.u32 %v274, 7
    %v276 = vsub.s32 %v248, %v275
    %v277 = vrot.slane %v176, %v276
    %v278 = vlaneseq
    %v279 = vshrl.u32 %v278, 7
    %v280 = vsub.s32 %v253, %v279
    %v281 = vrot.slane %v177, %v280
    %v282 = vsel %vm258, %v281, %v277
    %v283 = vlaneseq
    %v284 = vshrl.u32 %v283, 7
    %v285 = vsub.s32 %v260, %v284
    %v286 = vrot.slane %v178, %v285
    %v287 = vsel %vm265, %v286, %v282
    %v288 = vlaneseq
    %v289 = vshrl.u32 %v288, 7
    %v290 = vsub.s32 %v267, %v289
    %v291 = vrot.slane %v179, %v290
    %v292 = vsel %vm272, %v291, %v287
    %v293 = vlaneseq
    %v294 = vshrl.u32 %v293, 7
    %v295 = vsub.s32 %v248, %v294
    %v296 = vrot.slane %v180, %v295
    %v297 = vlaneseq
    %v298 = vshrl.u32 %v297, 7
    %v299 = vsub.s32 %v253, %v298
    %v300 = vrot.slane %v181, %v299
    %v301 = vsel %vm258, %v300, %v296
    %v302 = vlaneseq
    %v303 = vshrl.u32 %v302, 7
    %v304 = vsub.s32 %v260, %v303
    %v305 = vrot.slane %v182, %v304
    %v306 = vsel %vm265, %v305, %v301
    %v307 = vlaneseq
    %v308 = vshrl.u32 %v307, 7
    %v309 = vsub.s32 %v267, %v308
    %v310 = vrot.slane %v183, %v309
    %v311 = vsel %vm272, %v310, %v306
    %v312 = vlaneseq
    %v313 = vshrl.u32 %v312, 7
    %v314 = vsub.s32 %v248, %v313
    %v315 = vrot.slane %v184, %v314
    %v316 = vlaneseq
    %v317 = vshrl.u32 %v316, 7
    %v318 = vsub.s32 %v253, %v317
    %v319 = vrot.slane %v185, %v318
    %v320 = vsel %vm258, %v319, %v315
    %v321 = vlaneseq
    %v322 = vshrl.u32 %v321, 7
    %v323 = vsub.s32 %v260, %v322
    %v324 = vrot.slane %v186, %v323
    %v325 = vsel %vm265, %v324, %v320
    %v326 = vlaneseq
    %v327 = vshrl.u32 %v326, 7
    %v328 = vsub.s32 %v267, %v327
    %v329 = vrot.slane %v187, %v328
    %v330 = vsel %vm272, %v329, %v325
    %v331 = vlaneseq
    %v332 = vshrl.u32 %v331, 7
    %v333 = vsub.s32 %v248, %v332
    %v334 = vrot.slane %v188, %v333
    %v335 = vlaneseq
    %v336 = vshrl.u32 %v335, 7
    %v337 = vsub.s32 %v253, %v336
    %v338 = vrot.slane %v189, %v337
    %v339 = vsel %vm258, %v338, %v334
    %v340 = vlaneseq
    %v341 = vshrl.u32 %v340, 7
    %v342 = vsub.s32 %v260, %v341
    %v343 = vrot.slane %v190, %v342
    %v344 = vsel %vm265, %v343, %v339
    %v345 = vlaneseq
    %v346 = vshrl.u32 %v345, 7
    %v347 = vsub.s32 %v267, %v346
    %v348 = vrot.slane %v191, %v347
    %v349 = vsel %vm272, %v348, %v344
    %v350 = vlaneseq
    %v351 = vshrl.u32 %v350, 7
    %v352 = vsub.s32 %v248, %v351
    %v353 = vrot.slane %v192, %v352
    %v354 = vlaneseq
    %v355 = vshrl.u32 %v354, 7
    %v356 = vsub.s32 %v253, %v355
    %v357 = vrot.slane %v193, %v356
    %v358 = vsel %vm258, %v357, %v353
    %v359 = vlaneseq
    %v360 = vshrl.u32 %v359, 7
    %v361 = vsub.s32 %v260, %v360
    %v362 = vrot.slane %v194, %v361
    %v363 = vsel %vm265, %v362, %v358
    %v364 = vlaneseq
    %v365 = vshrl.u32 %v364, 7
    %v366 = vsub.s32 %v267, %v365
    %v367 = vrot.slane %v195, %v366
    %v368 = vsel %vm272, %v367, %v363
    %v369 = vlaneseq
    %v370 = vshrl.u32 %v369, 7
    %v371 = vsub.s32 %v248, %v370
    %v372 = vrot.slane %v196, %v371
    %v373 = vlaneseq
    %v374 = vshrl.u32 %v373, 7
    %v375 = vsub.s32 %v253, %v374
    %v376 = vrot.slane %v197, %v375
    %v377 = vsel %vm258, %v376, %v372
    %v378 = vlaneseq
    %v379 = vshrl.u32 %v378, 7
    %v380 = vsub.s32 %v260, %v379
    %v381 = vrot.slane %v198, %v380
    %v382 = vsel %vm265, %v381, %v377
    %v383 = vlaneseq
    %v384 = vshrl.u32 %v383, 7
    %v385 = vsub.s32 %v267, %v384
    %v386 = vrot.slane %v199, %v385
    %v387 = vsel %vm272, %v386, %v382
    %v388 = vlaneseq
    %v389 = vshrl.u32 %v388, 7
    %v390 = vsub.s32 %v248, %v389
    %v391 = vrot.slane %v200, %v390
    %v392 = vlaneseq
    %v393 = vshrl.u32 %v392, 7
    %v394 = vsub.s32 %v253, %v393
    %v395 = vrot.slane %v201, %v394
    %v396 = vsel %vm258, %v395, %v391
    %v397 = vlaneseq
    %v398 = vshrl.u32 %v397, 7
    %v399 = vsub.s32 %v260, %v398
    %v400 = vrot.slane %v202, %v399
    %v401 = vsel %vm265, %v400, %v396
    %v402 = vlaneseq
    %v403 = vshrl.u32 %v402, 7
    %v404 = vsub.s32 %v267, %v403
    %v405 = vrot.slane %v203, %v404
    %v406 = vsel %vm272, %v405, %v401
    %vm407 = vcmask 1041409
    %v408 = vsel %vm407, %v292, %v273
    %vm409 = vcmask 1042434
    %v410 = vsel %vm409, %v311, %v408
    %vm411 = vcmask 1043459
    %v412 = vsel %vm411, %v330, %v410
    %vm413 = vcmask 1044484
    %v414 = vsel %vm413, %v349, %v412
    %vm415 = vcmask 1045509
    %v416 = vsel %vm415, %v368, %v414
    %vm417 = vcmask 1046534
    %v418 = vsel %vm417, %v387, %v416
    %vm419 = vcmask 1047559
    %v420 = vsel %vm419, %v406, %v418
    %vm421 = vcmask 261120
    %v422 = vsel %vm421, %v420, 0
    %424 = vmatprep.subr.mxu0 0.0
    %v425 = vand.u32 %v204, 4294901760
    %426 = vmatpush1.msra.mxu0 %v425
    %427 = vmatprep.subr.mxu0 0.0
    %v428 = vand.u32 %v205, 4294901760
    %429 = vmatpush1.msra.mxu0 %v428
    %430 = vmatprep.subr.mxu0 0.0
    %v431 = vand.u32 %v206, 4294901760
    %432 = vmatpush1.msra.mxu0 %v431
    %433 = vmatprep.subr.mxu0 0.0
    %v434 = vand.u32 %v207, 4294901760
    %435 = vmatpush1.msra.mxu0 %v434
    %436 = vmatprep.subr.mxu0 0.0
    %437 = vmatpush1.msra.mxu0 0.0
    %438 = vmatprep.subr.mxu0 0.0
    %439 = vmatpush1.msra.mxu0 0.0
    %440 = vmatprep.subr.mxu0 0.0
    %441 = vmatpush1.msra.mxu0 0.0
    %442 = vmatprep.subr.mxu0 0.0
    %443 = vmatpush1.msra.mxu0 0.0
    %444 = vmatprep.subr.mxu0 0.0
    %445 = vmatpush1.msra.mxu0 0.0
    %446 = vmatprep.subr.mxu0 0.0
    %447 = vmatpush1.msra.mxu0 0.0
    %448 = vmatprep.subr.mxu0 0.0
    %449 = vmatpush1.msra.mxu0 0.0
    %450 = vmatprep.subr.mxu0 0.0
    %451 = vmatpush1.msra.mxu0 0.0
    %452 = vmatprep.subr.mxu0 0.0
    %453 = vmatpush1.msra.mxu0 0.0
    %454 = vmatprep.subr.mxu0 0.0
    %455 = vmatpush1.msra.mxu0 0.0
    %456 = vmatprep.subr.mxu0 0.0
    %457 = vmatpush1.msra.mxu0 0.0
    %458 = vmatprep.subr.mxu0 0.0
    %459 = vmatpush1.msra.mxu0 0.0
    %460 = vmatprep.subr.mxu0 0.0
    %461 = vmatpush1.msra.mxu0 0.0
    %462 = vmatprep.subr.mxu0 0.0
    %463 = vmatpush1.msra.mxu0 0.0
    %464 = vmatprep.subr.mxu0 0.0
    %465 = vmatpush1.msra.mxu0 0.0
    %466 = vmatprep.subr.mxu0 0.0
    %467 = vmatpush1.msra.mxu0 0.0
    %468 = vmatprep.subr.mxu0 0.0
    %469 = vmatpush1.msra.mxu0 0.0
    %470 = vmatprep.subr.mxu0 0.0
    %471 = vmatpush1.msra.mxu0 0.0
    %472 = vmatprep.subr.mxu0 0.0
    %473 = vmatpush1.msra.mxu0 0.0
    %474 = vmatprep.subr.mxu0 0.0
    %475 = vmatpush1.msra.mxu0 0.0
    %476 = vmatprep.subr.mxu0 0.0
    %477 = vmatpush1.msra.mxu0 0.0
    %478 = vmatprep.subr.mxu0 0.0
    %479 = vmatpush1.msra.mxu0 0.0
    %480 = vmatprep.subr.mxu0 0.0
    %481 = vmatpush1.msra.mxu0 0.0
    %482 = vmatprep.subr.mxu0 0.0
    %483 = vmatpush1.msra.mxu0 0.0
    %484 = vmatprep.subr.mxu0 0.0
    %485 = vmatpush1.msra.mxu0 0.0
    %486 = vmatprep.subr.mxu0 0.0
    %487 = vmatpush1.msra.mxu0 0.0
    %488 = vmatprep.subr.mxu0 0.0
    %489 = vmatpush1.msra.mxu0 0.0
    %490 = vmatprep.subr.mxu0 0.0
    %491 = vmatpush1.msra.mxu0 0.0
    %492 = vmatprep.mubr.f32.mxu0 0.0
    %v493 = vand.u32 %v422, 4294901760
    %v494 = vsub.f32 %v422, %v493
    %v495 = vand.u32 %v494, 4294901760
    %v496 = vsub.f32 %v494, %v495
    %v497 = vand.u32 %v496, 4294901760
    %498 = vmatmul.mubr.f32.gmra.mrb[0].mxu0 %v497
    %v499 = vpop.f32.mrb[0].mxu0
    %v500 = vadd.f32 %v213, %v499
    %v501 = vpop.f32.mrb[0].mxu0
    %502 = vdwg.mxu0
    %503 = vmatprep.subr.mxu0 0.0
    %v504 = vand.u32 %v204, 4294901760
    %v505 = vsub.f32 %v204, %v504
    %v506 = vand.u32 %v505, 4294901760
    %v507 = vsub.f32 %v505, %v506
    %v508 = vand.u32 %v507, 4294901760
    %509 = vmatpush1.msra.mxu0 %v508
    %510 = vmatprep.subr.mxu0 0.0
    %v511 = vand.u32 %v205, 4294901760
    %v512 = vsub.f32 %v205, %v511
    %v513 = vand.u32 %v512, 4294901760
    %v514 = vsub.f32 %v512, %v513
    %v515 = vand.u32 %v514, 4294901760
    %516 = vmatpush1.msra.mxu0 %v515
    %517 = vmatprep.subr.mxu0 0.0
    %v518 = vand.u32 %v206, 4294901760
    %v519 = vsub.f32 %v206, %v518
    %v520 = vand.u32 %v519, 4294901760
    %v521 = vsub.f32 %v519, %v520
    %v522 = vand.u32 %v521, 4294901760
    %523 = vmatpush1.msra.mxu0 %v522
    %524 = vmatprep.subr.mxu0 0.0
    %v525 = vand.u32 %v207, 4294901760
    %v526 = vsub.f32 %v207, %v525
    %v527 = vand.u32 %v526, 4294901760
    %v528 = vsub.f32 %v526, %v527
    %v529 = vand.u32 %v528, 4294901760
    %530 = vmatpush1.msra.mxu0 %v529
    %531 = vmatprep.subr.mxu0 0.0
    %532 = vmatpush1.msra.mxu0 0.0
    %533 = vmatprep.subr.mxu0 0.0
    %534 = vmatpush1.msra.mxu0 0.0
    %535 = vmatprep.subr.mxu0 0.0
    %536 = vmatpush1.msra.mxu0 0.0
    %537 = vmatprep.subr.mxu0 0.0
    %538 = vmatpush1.msra.mxu0 0.0
    %539 = vmatprep.subr.mxu0 0.0
    %540 = vmatpush1.msra.mxu0 0.0
    %541 = vmatprep.subr.mxu0 0.0
    %542 = vmatpush1.msra.mxu0 0.0
    %543 = vmatprep.subr.mxu0 0.0
    %544 = vmatpush1.msra.mxu0 0.0
    %545 = vmatprep.subr.mxu0 0.0
    %546 = vmatpush1.msra.mxu0 0.0
    %547 = vmatprep.subr.mxu0 0.0
    %548 = vmatpush1.msra.mxu0 0.0
    %549 = vmatprep.subr.mxu0 0.0
    %550 = vmatpush1.msra.mxu0 0.0
    %551 = vmatprep.subr.mxu0 0.0
    %552 = vmatpush1.msra.mxu0 0.0
    %553 = vmatprep.subr.mxu0 0.0
    %554 = vmatpush1.msra.mxu0 0.0
    %555 = vmatprep.subr.mxu0 0.0
    %556 = vmatpush1.msra.mxu0 0.0
    %557 = vmatprep.subr.mxu0 0.0
    %558 = vmatpush1.msra.mxu0 0.0
    %559 = vmatprep.subr.mxu0 0.0
    %560 = vmatpush1.msra.mxu0 0.0
    %561 = vmatprep.subr.mxu0 0.0
    %562 = vmatpush1.msra.mxu0 0.0
    %563 = vmatprep.subr.mxu0 0.0
    %564 = vmatpush1.msra.mxu0 0.0
    %565 = vmatprep.subr.mxu0 0.0
    %566 = vmatpush1.msra.mxu0 0.0
    %567 = vmatprep.subr.mxu0 0.0
    %568 = vmatpush1.msra.mxu0 0.0
    %569 = vmatprep.subr.mxu0 0.0
    %570 = vmatpush1.msra.mxu0 0.0
    %571 = vmatprep.subr.mxu0 0.0
    %572 = vmatpush1.msra.mxu0 0.0
    %573 = vmatprep.subr.mxu0 0.0
    %574 = vmatpush1.msra.mxu0 0.0
    %575 = vmatprep.subr.mxu0 0.0
    %576 = vmatpush1.msra.mxu0 0.0
    %577 = vmatprep.subr.mxu0 0.0
    %578 = vmatpush1.msra.mxu0 0.0
    %579 = vmatprep.subr.mxu0 0.0
    %580 = vmatpush1.msra.mxu0 0.0
    %581 = vmatprep.subr.mxu0 0.0
    %582 = vmatpush1.msra.mxu0 0.0
    %583 = vmatprep.subr.mxu0 0.0
    %584 = vmatpush1.msra.mxu0 0.0
    %585 = vmatprep.subr.mxu0 0.0
    %586 = vmatpush1.msra.mxu0 0.0
    %587 = vmatprep.mubr.f32.mxu0 0.0
    %v588 = vand.u32 %v422, 4294901760
    %589 = vmatmul.mubr.f32.gmra.mrb[0].mxu0 %v588
    %v590 = vpop.f32.mrb[0].mxu0
    %v591 = vadd.f32 %v500, %v590
    %v592 = vpop.f32.mrb[0].mxu0
    %593 = vdwg.mxu0
    %594 = vmatprep.subr.mxu0 0.0
    %v595 = vand.u32 %v204, 4294901760
    %v596 = vsub.f32 %v204, %v595
    %597 = vmatpush1.msra.mxu0 %v596
    %598 = vmatprep.subr.mxu0 0.0
    %v599 = vand.u32 %v205, 4294901760
    %v600 = vsub.f32 %v205, %v599
    %601 = vmatpush1.msra.mxu0 %v600
    %602 = vmatprep.subr.mxu0 0.0
    %v603 = vand.u32 %v206, 4294901760
    %v604 = vsub.f32 %v206, %v603
    %605 = vmatpush1.msra.mxu0 %v604
    %606 = vmatprep.subr.mxu0 0.0
    %v607 = vand.u32 %v207, 4294901760
    %v608 = vsub.f32 %v207, %v607
    %609 = vmatpush1.msra.mxu0 %v608
    %610 = vmatprep.subr.mxu0 0.0
    %611 = vmatpush1.msra.mxu0 0.0
    %612 = vmatprep.subr.mxu0 0.0
    %613 = vmatpush1.msra.mxu0 0.0
    %614 = vmatprep.subr.mxu0 0.0
    %615 = vmatpush1.msra.mxu0 0.0
    %616 = vmatprep.subr.mxu0 0.0
    %617 = vmatpush1.msra.mxu0 0.0
    %618 = vmatprep.subr.mxu0 0.0
    %619 = vmatpush1.msra.mxu0 0.0
    %620 = vmatprep.subr.mxu0 0.0
    %621 = vmatpush1.msra.mxu0 0.0
    %622 = vmatprep.subr.mxu0 0.0
    %623 = vmatpush1.msra.mxu0 0.0
    %624 = vmatprep.subr.mxu0 0.0
    %625 = vmatpush1.msra.mxu0 0.0
    %626 = vmatprep.subr.mxu0 0.0
    %627 = vmatpush1.msra.mxu0 0.0
    %628 = vmatprep.subr.mxu0 0.0
    %629 = vmatpush1.msra.mxu0 0.0
    %630 = vmatprep.subr.mxu0 0.0
    %631 = vmatpush1.msra.mxu0 0.0
    %632 = vmatprep.subr.mxu0 0.0
    %633 = vmatpush1.msra.mxu0 0.0
    %634 = vmatprep.subr.mxu0 0.0
    %635 = vmatpush1.msra.mxu0 0.0
    %636 = vmatprep.subr.mxu0 0.0
    %637 = vmatpush1.msra.mxu0 0.0
    %638 = vmatprep.subr.mxu0 0.0
    %639 = vmatpush1.msra.mxu0 0.0
    %640 = vmatprep.subr.mxu0 0.0
    %641 = vmatpush1.msra.mxu0 0.0
    %642 = vmatprep.subr.mxu0 0.0
    %643 = vmatpush1.msra.mxu0 0.0
    %644 = vmatprep.subr.mxu0 0.0
    %645 = vmatpush1.msra.mxu0 0.0
    %646 = vmatprep.subr.mxu0 0.0
    %647 = vmatpush1.msra.mxu0 0.0
    %648 = vmatprep.subr.mxu0 0.0
    %649 = vmatpush1.msra.mxu0 0.0
    %650 = vmatprep.subr.mxu0 0.0
    %651 = vmatpush1.msra.mxu0 0.0
    %652 = vmatprep.subr.mxu0 0.0
    %653 = vmatpush1.msra.mxu0 0.0
    %654 = vmatprep.subr.mxu0 0.0
    %655 = vmatpush1.msra.mxu0 0.0
    %656 = vmatprep.subr.mxu0 0.0
    %657 = vmatpush1.msra.mxu0 0.0
    %658 = vmatprep.subr.mxu0 0.0
    %659 = vmatpush1.msra.mxu0 0.0
    %660 = vmatprep.subr.mxu0 0.0
    %661 = vmatpush1.msra.mxu0 0.0
    %662 = vmatprep.subr.mxu0 0.0
    %663 = vmatpush1.msra.mxu0 0.0
    %664 = vmatprep.subr.mxu0 0.0
    %665 = vmatpush1.msra.mxu0 0.0
    %666 = vmatprep.mubr.f32.mxu0 0.0
    %v667 = vand.u32 %v422, 4294901760
    %v668 = vsub.f32 %v422, %v667
    %669 = vmatmul.mubr.f32.gmra.mrb[0].mxu0 %v668
    %v670 = vpop.f32.mrb[0].mxu0
    %v671 = vadd.f32 %v591, %v670
    %v672 = vpop.f32.mrb[0].mxu0
    %673 = vdwg.mxu0
    %674 = vmatprep.subr.mxu0 0.0
    %v675 = vand.u32 %v204, 4294901760
    %676 = vmatpush1.msra.mxu0 %v675
    %677 = vmatprep.subr.mxu0 0.0
    %v678 = vand.u32 %v205, 4294901760
    %679 = vmatpush1.msra.mxu0 %v678
    %680 = vmatprep.subr.mxu0 0.0
    %v681 = vand.u32 %v206, 4294901760
    %682 = vmatpush1.msra.mxu0 %v681
    %683 = vmatprep.subr.mxu0 0.0
    %v684 = vand.u32 %v207, 4294901760
    %685 = vmatpush1.msra.mxu0 %v684
    %686 = vmatprep.subr.mxu0 0.0
    %687 = vmatpush1.msra.mxu0 0.0
    %688 = vmatprep.subr.mxu0 0.0
    %689 = vmatpush1.msra.mxu0 0.0
    %690 = vmatprep.subr.mxu0 0.0
    %691 = vmatpush1.msra.mxu0 0.0
    %692 = vmatprep.subr.mxu0 0.0
    %693 = vmatpush1.msra.mxu0 0.0
    %694 = vmatprep.subr.mxu0 0.0
    %695 = vmatpush1.msra.mxu0 0.0
    %696 = vmatprep.subr.mxu0 0.0
    %697 = vmatpush1.msra.mxu0 0.0
    %698 = vmatprep.subr.mxu0 0.0
    %699 = vmatpush1.msra.mxu0 0.0
    %700 = vmatprep.subr.mxu0 0.0
    %701 = vmatpush1.msra.mxu0 0.0
    %702 = vmatprep.subr.mxu0 0.0
    %703 = vmatpush1.msra.mxu0 0.0
    %704 = vmatprep.subr.mxu0 0.0
    %705 = vmatpush1.msra.mxu0 0.0
    %706 = vmatprep.subr.mxu0 0.0
    %707 = vmatpush1.msra.mxu0 0.0
    %708 = vmatprep.subr.mxu0 0.0
    %709 = vmatpush1.msra.mxu0 0.0
    %710 = vmatprep.subr.mxu0 0.0
    %711 = vmatpush1.msra.mxu0 0.0
    %712 = vmatprep.subr.mxu0 0.0
    %713 = vmatpush1.msra.mxu0 0.0
    %714 = vmatprep.subr.mxu0 0.0
    %715 = vmatpush1.msra.mxu0 0.0
    %716 = vmatprep.subr.mxu0 0.0
    %717 = vmatpush1.msra.mxu0 0.0
    %718 = vmatprep.subr.mxu0 0.0
    %719 = vmatpush1.msra.mxu0 0.0
    %720 = vmatprep.subr.mxu0 0.0
    %721 = vmatpush1.msra.mxu0 0.0
    %722 = vmatprep.subr.mxu0 0.0
    %723 = vmatpush1.msra.mxu0 0.0
    %724 = vmatprep.subr.mxu0 0.0
    %725 = vmatpush1.msra.mxu0 0.0
    %726 = vmatprep.subr.mxu0 0.0
    %727 = vmatpush1.msra.mxu0 0.0
    %728 = vmatprep.subr.mxu0 0.0
    %729 = vmatpush1.msra.mxu0 0.0
    %730 = vmatprep.subr.mxu0 0.0
    %731 = vmatpush1.msra.mxu0 0.0
    %732 = vmatprep.subr.mxu0 0.0
    %733 = vmatpush1.msra.mxu0 0.0
    %734 = vmatprep.subr.mxu0 0.0
    %735 = vmatpush1.msra.mxu0 0.0
    %736 = vmatprep.subr.mxu0 0.0
    %737 = vmatpush1.msra.mxu0 0.0
    %738 = vmatprep.subr.mxu0 0.0
    %739 = vmatpush1.msra.mxu0 0.0
    %740 = vmatprep.subr.mxu0 0.0
    %741 = vmatpush1.msra.mxu0 0.0
    %742 = vmatprep.mubr.f32.mxu0 0.0
    %v743 = vand.u32 %v422, 4294901760
    %v744 = vsub.f32 %v422, %v743
    %v745 = vand.u32 %v744, 4294901760
    %746 = vmatmul.mubr.f32.gmra.mrb[0].mxu0 %v745
    %v747 = vpop.f32.mrb[0].mxu0
    %v748 = vadd.f32 %v671, %v747
    %v749 = vpop.f32.mrb[0].mxu0
    %750 = vdwg.mxu0
    %751 = vmatprep.subr.mxu0 0.0
    %v752 = vand.u32 %v204, 4294901760
    %v753 = vsub.f32 %v204, %v752
    %v754 = vand.u32 %v753, 4294901760
    %755 = vmatpush1.msra.mxu0 %v754
    %756 = vmatprep.subr.mxu0 0.0
    %v757 = vand.u32 %v205, 4294901760
    %v758 = vsub.f32 %v205, %v757
    %v759 = vand.u32 %v758, 4294901760
    %760 = vmatpush1.msra.mxu0 %v759
    %761 = vmatprep.subr.mxu0 0.0
    %v762 = vand.u32 %v206, 4294901760
    %v763 = vsub.f32 %v206, %v762
    %v764 = vand.u32 %v763, 4294901760
    %765 = vmatpush1.msra.mxu0 %v764
    %766 = vmatprep.subr.mxu0 0.0
    %v767 = vand.u32 %v207, 4294901760
    %v768 = vsub.f32 %v207, %v767
    %v769 = vand.u32 %v768, 4294901760
    %770 = vmatpush1.msra.mxu0 %v769
    %771 = vmatprep.subr.mxu0 0.0
    %772 = vmatpush1.msra.mxu0 0.0
    %773 = vmatprep.subr.mxu0 0.0
    %774 = vmatpush1.msra.mxu0 0.0
    %775 = vmatprep.subr.mxu0 0.0
    %776 = vmatpush1.msra.mxu0 0.0
    %777 = vmatprep.subr.mxu0 0.0
    %778 = vmatpush1.msra.mxu0 0.0
    %779 = vmatprep.subr.mxu0 0.0
    %780 = vmatpush1.msra.mxu0 0.0
    %781 = vmatprep.subr.mxu0 0.0
    %782 = vmatpush1.msra.mxu0 0.0
    %783 = vmatprep.subr.mxu0 0.0
    %784 = vmatpush1.msra.mxu0 0.0
    %785 = vmatprep.subr.mxu0 0.0
    %786 = vmatpush1.msra.mxu0 0.0
    %787 = vmatprep.subr.mxu0 0.0
    %788 = vmatpush1.msra.mxu0 0.0
    %789 = vmatprep.subr.mxu0 0.0
    %790 = vmatpush1.msra.mxu0 0.0
    %791 = vmatprep.subr.mxu0 0.0
    %792 = vmatpush1.msra.mxu0 0.0
    %793 = vmatprep.subr.mxu0 0.0
    %794 = vmatpush1.msra.mxu0 0.0
    %795 = vmatprep.subr.mxu0 0.0
    %796 = vmatpush1.msra.mxu0 0.0
    %797 = vmatprep.subr.mxu0 0.0
    %798 = vmatpush1.msra.mxu0 0.0
    %799 = vmatprep.subr.mxu0 0.0
    %800 = vmatpush1.msra.mxu0 0.0
    %801 = vmatprep.subr.mxu0 0.0
    %802 = vmatpush1.msra.mxu0 0.0
    %803 = vmatprep.subr.mxu0 0.0
    %804 = vmatpush1.msra.mxu0 0.0
    %805 = vmatprep.subr.mxu0 0.0
    %806 = vmatpush1.msra.mxu0 0.0
    %807 = vmatprep.subr.mxu0 0.0
    %808 = vmatpush1.msra.mxu0 0.0
    %809 = vmatprep.subr.mxu0 0.0
    %810 = vmatpush1.msra.mxu0 0.0
    %811 = vmatprep.subr.mxu0 0.0
    %812 = vmatpush1.msra.mxu0 0.0
    %813 = vmatprep.subr.mxu0 0.0
    %814 = vmatpush1.msra.mxu0 0.0
    %815 = vmatprep.subr.mxu0 0.0
    %816 = vmatpush1.msra.mxu0 0.0
    %817 = vmatprep.subr.mxu0 0.0
    %818 = vmatpush1.msra.mxu0 0.0
    %819 = vmatprep.subr.mxu0 0.0
    %820 = vmatpush1.msra.mxu0 0.0
    %821 = vmatprep.subr.mxu0 0.0
    %822 = vmatpush1.msra.mxu0 0.0
    %823 = vmatprep.subr.mxu0 0.0
    %824 = vmatpush1.msra.mxu0 0.0
    %825 = vmatprep.subr.mxu0 0.0
    %826 = vmatpush1.msra.mxu0 0.0
    %827 = vmatprep.mubr.f32.mxu0 0.0
    %v828 = vand.u32 %v422, 4294901760
    %829 = vmatmul.mubr.f32.gmra.mrb[0].mxu0 %v828
    %v830 = vpop.f32.mrb[0].mxu0
    %v831 = vadd.f32 %v748, %v830
    %v832 = vpop.f32.mrb[0].mxu0
    %833 = vdwg.mxu0
    %834 = vmatprep.subr.mxu0 0.0
    %v835 = vand.u32 %v204, 4294901760
    %836 = vmatpush1.msra.mxu0 %v835
    %837 = vmatprep.subr.mxu0 0.0
    %v838 = vand.u32 %v205, 4294901760
    %839 = vmatpush1.msra.mxu0 %v838
    %840 = vmatprep.subr.mxu0 0.0
    %v841 = vand.u32 %v206, 4294901760
    %842 = vmatpush1.msra.mxu0 %v841
    %843 = vmatprep.subr.mxu0 0.0
    %v844 = vand.u32 %v207, 4294901760
    %845 = vmatpush1.msra.mxu0 %v844
    %846 = vmatprep.subr.mxu0 0.0
    %847 = vmatpush1.msra.mxu0 0.0
    %848 = vmatprep.subr.mxu0 0.0
    %849 = vmatpush1.msra.mxu0 0.0
    %850 = vmatprep.subr.mxu0 0.0
    %851 = vmatpush1.msra.mxu0 0.0
    %852 = vmatprep.subr.mxu0 0.0
    %853 = vmatpush1.msra.mxu0 0.0
    %854 = vmatprep.subr.mxu0 0.0
    %855 = vmatpush1.msra.mxu0 0.0
    %856 = vmatprep.subr.mxu0 0.0
    %857 = vmatpush1.msra.mxu0 0.0
    %858 = vmatprep.subr.mxu0 0.0
    %859 = vmatpush1.msra.mxu0 0.0
    %860 = vmatprep.subr.mxu0 0.0
    %861 = vmatpush1.msra.mxu0 0.0
    %862 = vmatprep.subr.mxu0 0.0
    %863 = vmatpush1.msra.mxu0 0.0
    %864 = vmatprep.subr.mxu0 0.0
    %865 = vmatpush1.msra.mxu0 0.0
    %866 = vmatprep.subr.mxu0 0.0
    %867 = vmatpush1.msra.mxu0 0.0
    %868 = vmatprep.subr.mxu0 0.0
    %869 = vmatpush1.msra.mxu0 0.0
    %870 = vmatprep.subr.mxu0 0.0
    %871 = vmatpush1.msra.mxu0 0.0
    %872 = vmatprep.subr.mxu0 0.0
    %873 = vmatpush1.msra.mxu0 0.0
    %874 = vmatprep.subr.mxu0 0.0
    %875 = vmatpush1.msra.mxu0 0.0
    %876 = vmatprep.subr.mxu0 0.0
    %877 = vmatpush1.msra.mxu0 0.0
    %878 = vmatprep.subr.mxu0 0.0
    %879 = vmatpush1.msra.mxu0 0.0
    %880 = vmatprep.subr.mxu0 0.0
    %881 = vmatpush1.msra.mxu0 0.0
    %882 = vmatprep.subr.mxu0 0.0
    %883 = vmatpush1.msra.mxu0 0.0
    %884 = vmatprep.subr.mxu0 0.0
    %885 = vmatpush1.msra.mxu0 0.0
    %886 = vmatprep.subr.mxu0 0.0
    %887 = vmatpush1.msra.mxu0 0.0
    %888 = vmatprep.subr.mxu0 0.0
    %889 = vmatpush1.msra.mxu0 0.0
    %890 = vmatprep.subr.mxu0 0.0
    %891 = vmatpush1.msra.mxu0 0.0
    %892 = vmatprep.subr.mxu0 0.0
    %893 = vmatpush1.msra.mxu0 0.0
    %894 = vmatprep.subr.mxu0 0.0
    %895 = vmatpush1.msra.mxu0 0.0
    %896 = vmatprep.subr.mxu0 0.0
    %897 = vmatpush1.msra.mxu0 0.0
    %898 = vmatprep.subr.mxu0 0.0
    %899 = vmatpush1.msra.mxu0 0.0
    %900 = vmatprep.subr.mxu0 0.0
    %901 = vmatpush1.msra.mxu0 0.0
    %902 = vmatprep.mubr.f32.mxu0 0.0
    %v903 = vand.u32 %v422, 4294901760
    %904 = vmatmul.mubr.f32.gmra.mrb[0].mxu0 %v903
    %v905 = vpop.f32.mrb[0].mxu0
    %v906 = vadd.f32 %v831, %v905
    %v907 = vpop.f32.mrb[0].mxu0
    %908 = vdwg.mxu0
    %909 = vst [vmem:[#allocation7] sm:$0xff] %v906
    // Predicated region
    $region22: #{tpu_custom_call.1} parent=1 // pred_check
      _
    $region23: #{tpu_custom_call.1} parent=1 // pred_check_branch
      %911 = sbr.rel (0) target = $region25
    $region24: #{tpu_custom_call.1} parent=1 // pred_region
      %s913 = ssub.s32 128, 128
      %914 = vsyncadd [#allocation4], %s913
      %s916 = sshll.u32 [#allocation7], 4
      %s917 = int_to_ptr.vmem [resolvable:$true] %s916
      %919 = dma.vmem_to_hbm [thread:$0]  %s917, 128, %s3, [#allocation4]
    $region25: #{tpu_custom_call.1} parent=1 // pred_fallthru
      _
    // Predicated region
    $region26: #{tpu_custom_call.1} parent=1 // pred_check
      _
    $region27: #{tpu_custom_call.1} parent=1 // pred_check_branch
      %921 = sbr.rel (0) target = $region29
    $region28: #{tpu_custom_call.1} parent=1 // pred_region
      %922 = dma.done [#allocation4], 128
    $region29: #{tpu_custom_call.1} parent=1 // pred_fallthru
      _
    %923 = vsyncpa [#allocation3], 1
    %924 = vsyncpa [#allocation6], 1
    %925 = vsyncpa [#allocation4], 1

</llo_original>
